<compile_context>
chip_gen: v7x
topology: tpu7x:2x2x1
jax: 0.10.0
libtpu: 0.0.40
codegen_flags: <defaults>
</compile_context>

<pallas_src>
import functools
import math

import jax
import jax.numpy as jnp
from jax.experimental import pallas as pl
from jax.experimental.pallas import tpu as pltpu


def _ohem_ce_kernel(target_ref, score_ref, sum_ref, cnt_ref, sum_acc, cnt_acc,
                    *, ignore_label, neg_log_thresh, hw, tile_hw, ragged):
    j = pl.program_id(2)

    @pl.when(j == 0)
    def _():
        sum_acc[...] = jnp.zeros_like(sum_acc)
        cnt_acc[...] = jnp.zeros_like(cnt_acc)

    t = target_ref[...]                                           # (1, tile_hw) int32
    z = score_ref[...].astype(jnp.float32)                        # (C, tile_hw)

    # numerically stable log-sum-exp over the class (sublane) axis
    zmax = jnp.max(z, axis=0, keepdims=True)                      # (1, tile_hw)
    lse = zmax + jnp.log(jnp.sum(jnp.exp(z - zmax), axis=0, keepdims=True))

    valid = t != ignore_label                                     # (1, tile_hw)
    if ragged:
        # Only the very last pixel chunk can read past the end of the array;
        # the mask is built / applied only on (1, tile_hw)-wide vectors.
        chunk = pl.program_id(1) * pl.num_programs(2) + j
        lane = jax.lax.broadcasted_iota(jnp.int32, (1, tile_hw), 1)
        px_valid = (chunk * tile_hw + lane) < hw
        valid = jnp.logical_and(valid, px_valid)

    tmp_t = jnp.where(valid, t, 0)                                # ignore -> class 0

    class_ids = jax.lax.broadcasted_iota(jnp.int32, z.shape, 0)   # (C, tile_hw)
    z_t = jnp.sum(jnp.where(class_ids == tmp_t, z, 0.0),
                  axis=0, keepdims=True)                          # (1, tile_hw)

    loss = lse - z_t                                              # per-pixel CE
    if ragged:
        # keep NaN/Inf from garbage tail columns out of the accumulator
        loss = jnp.where(px_valid, loss, 0.0)

    # p_t < thresh  <=>  loss > -log(thresh)   (exp is monotonic)
    keep_f = jnp.logical_and(valid, loss > neg_log_thresh).astype(jnp.float32)

    sum_acc[...] += loss * keep_f                                 # pure VPU per tile
    cnt_acc[...] += keep_f

    @pl.when(j == pl.num_programs(2) - 1)
    def _():
        # single cross-lane reduction per (image, split)
        sum_ref[...] = jnp.sum(sum_acc[...], keepdims=True)       # (1, 1)
        cnt_ref[...] = jnp.sum(cnt_acc[...], keepdims=True)       # (1, 1)


def _round_down(x, m):
    return (x // m) * m


def _vmem_capacity_bytes():
    try:
        return int(pltpu.get_tpu_info().vmem_capacity_bytes)
    except Exception:
        return 64 * 1024 * 1024   # conservative fallback (v7x per-TC VMEM)


def ohem_cross_entropy(target, score, *, ignore_label=-1, thresh=0.9,
                       max_tile_hw=None):
    """target: (N, H, W) int ; score: (N, C, H, W) float  -> scalar loss."""
    N, C, H, W = score.shape
    # TODO(synk): bilinear upsample of `score` when its spatial size differs from
    # `target` is not implemented; spatial sizes must match (common case).
    assert target.shape == (N, H, W), "spatial size of score must match target"
    HW = H * W

    # Pure reshapes only: no transpose / dtype cast / pad of the big score array.
    score_3d = score.reshape(N, C, HW)
    target_3d = target.reshape(N, 1, HW)
    if target_3d.dtype != jnp.int32:
        target_3d = target_3d.astype(jnp.int32)

    # ---- adaptive, VMEM-budget-aware pixel tile -----------------------------
    vmem_cap = _vmem_capacity_bytes()
    score_itemsize = jnp.dtype(score.dtype).itemsize
    # per-pixel VMEM bytes: double-buffered score DMA + double-buffered int32
    # target + 2 f32 accumulators + ~3 live (C, tile) f32 kernel temporaries.
    per_pixel = 2 * C * score_itemsize + 2 * 4 + 2 * 4 + 3 * C * 4
    budget = vmem_cap // 2                 # leave headroom for compiler scratch
    max_tile = max(128, min(65536, _round_down(budget // per_pixel, 128)))
    if max_tile_hw is not None:            # explicit override (used in tests)
        max_tile = min(max_tile, max(128, _round_down(max_tile_hw, 128)))

    if HW <= max_tile:
        tile_hw = HW                       # one chunk; full-dim block always legal
        num_chunks = 1
    else:
        tile_hw = max_tile                 # multiple of 128; ragged tail masked in-kernel
        num_chunks = pl.cdiv(HW, tile_hw)
    ragged = (HW % tile_hw) != 0

    # Second 'parallel' grid axis over pixel chunks so v7x's second TensorCore
    # has work even when N == 1 (no cost on single-TC v5e/v6e).
    n_splits = 2 if (num_chunks >= 2 and num_chunks % 2 == 0) else 1
    cps = num_chunks // n_splits           # chunks per split

    kernel = functools.partial(
        _ohem_ce_kernel,
        ignore_label=ignore_label,
        neg_log_thresh=float(-math.log(thresh)),
        hw=HW, tile_hw=tile_hw, ragged=ragged)

    vmem_limit = int(vmem_cap * 3 // 4)    # explicit scoped-VMEM raise for big tiles

    sum_out, cnt_out = pl.pallas_call(
        kernel,
        out_shape=(jax.ShapeDtypeStruct((N * n_splits, 1, 1), jnp.float32),
                   jax.ShapeDtypeStruct((N * n_splits, 1, 1), jnp.float32)),
        grid_spec=pltpu.PrefetchScalarGridSpec(
            num_scalar_prefetch=0,
            grid=(N, n_splits, cps),
            in_specs=[pl.BlockSpec((None, 1, tile_hw),
                                   lambda n, s, j: (n, 0, s * cps + j)),   # target
                      pl.BlockSpec((None, C, tile_hw),
                                   lambda n, s, j: (n, 0, s * cps + j))],  # score
            out_specs=(pl.BlockSpec((None, 1, 1),
                                    lambda n, s, j: (n * n_splits + s, 0, 0)),
                       pl.BlockSpec((None, 1, 1),
                                    lambda n, s, j: (n * n_splits + s, 0, 0))),
            scratch_shapes=[pltpu.VMEM((1, tile_hw), jnp.float32),   # per-lane loss sum
                            pltpu.VMEM((1, tile_hw), jnp.float32)],  # per-lane keep count
        ),
        compiler_params=pltpu.CompilerParams(
            dimension_semantics=("parallel", "parallel", "arbitrary"),
            vmem_limit_bytes=vmem_limit),
    )(target_3d, score_3d)

    total = jnp.sum(sum_out)
    count = jnp.sum(cnt_out)
    # mean over the kept set; empty keep set -> NaN (torch's mean of an empty
    # tensor) but expressed without an actual 0/0 divide.
    return jnp.where(count > 0, total / jnp.maximum(count, 1.0), jnp.nan)


def _reference(target, score, ignore_label=-1, thresh=0.9):
    N, C, H, W = score.shape
    z = jnp.transpose(score, (0, 2, 3, 1)).reshape(-1, C).astype(jnp.float32)
    t = target.reshape(-1).astype(jnp.int32)
    lse = jax.nn.logsumexp(z, axis=-1)
    valid = t != ignore_label
    tt = jnp.where(valid, t, 0)
    z_t = jnp.take_along_axis(z, tt[:, None], axis=-1)[:, 0]
    loss = lse - z_t
    p_t = jnp.exp(z_t - lse)
    keep = valid & (p_t < thresh)
    return jnp.sum(jnp.where(keep, loss, 0.0)) / jnp.sum(keep.astype(jnp.float32))


if __name__ == "__main__":
    key = jax.random.PRNGKey(0)
    k1, k2, k3 = jax.random.split(key, 3)

    # Test 1: single-chunk path (tile == HW), batch-parallel only.
    N, C, H, W = 2, 4, 16, 16
    score = jax.random.normal(k1, (N, C, H, W), dtype=jnp.float32)
    labels = jax.random.randint(k2, (N, H, W), 0, C, dtype=jnp.int32)
    ignore_mask = jax.random.uniform(k3, (N, H, W)) < 0.1
    target = jnp.where(ignore_mask, -1, labels)

    out = jax.block_until_ready(
        ohem_cross_entropy(target, score, ignore_label=-1, thresh=0.9))
    ref = jax.block_until_ready(_reference(target, score))
    assert jnp.allclose(out, ref, rtol=1e-5, atol=1e-5), (out, ref)

    # Test 2: multi-chunk path with the spatial 'parallel' split and a masked
    # ragged tail (tile forced small so these paths are exercised at test size).
    k4, k5, k6 = jax.random.split(jax.random.PRNGKey(1), 3)
    N2, C2, H2, W2 = 1, 4, 30, 30
    score2 = jax.random.normal(k4, (N2, C2, H2, W2), dtype=jnp.float32)
    labels2 = jax.random.randint(k5, (N2, H2, W2), 0, C2, dtype=jnp.int32)
    target2 = jnp.where(jax.random.uniform(k6, (N2, H2, W2)) < 0.1, -1, labels2)

    out2 = jax.block_until_ready(
        ohem_cross_entropy(target2, score2, max_tile_hw=256))
    ref2 = jax.block_until_ready(_reference(target2, score2))
    assert jnp.allclose(out2, ref2, rtol=1e-5, atol=1e-5), (out2, ref2)

    print("KERNEL_OK")
</pallas_src>

<mosaic_0001>
module attributes {stable_mosaic.version = 11 : i64} {
  func.func @_ohem_ce_kernel(%arg0: i32, %arg1: i32, %arg2: i32, %arg3: memref<1x1x256xi32, #tpu.memory_space<vmem>>, %arg4: memref<1x4x256xf32, #tpu.memory_space<vmem>>, %arg5: memref<1x1x1xf32, #tpu.memory_space<vmem>>, %arg6: memref<1x1x1xf32, #tpu.memory_space<vmem>>, %arg7: memref<1x256xf32, #tpu.memory_space<vmem>>, %arg8: memref<1x256xf32, #tpu.memory_space<vmem>>) attributes {dimension_semantics = [#tpu.dimension_semantics<parallel>, #tpu.dimension_semantics<parallel>, #tpu.dimension_semantics<arbitrary>], iteration_bounds = array<i64: 2, 1, 1>, scalar_prefetch = 0 : i64, scratch_operands = 2 : i64, tpu.core_type = #tpu.core_type<tc>, window_params = [{transform_indices = @transform_0, window_bounds = array<i64: 1, 1, 256>}, {transform_indices = @transform_1, window_bounds = array<i64: 1, 4, 256>}, {transform_indices = @transform_2, window_bounds = array<i64: 1, 1, 1>}, {transform_indices = @transform_3, window_bounds = array<i64: 1, 1, 1>}]} {
    %c0_i32 = arith.constant 0 : i32
    %0 = arith.cmpi eq, %arg2, %c0_i32 : i32
    %1 = arith.extui %0 : i1 to i32
    %c0_i32_0 = arith.constant 0 : i32
    %2 = arith.cmpi ne, %1, %c0_i32_0 : i32
    scf.if %2 {
      %cst_21 = arith.constant 0.000000e+00 : f32
      %43 = vector.broadcast %cst_21 : f32 to vector<1x256xf32>
      %c0_22 = arith.constant 0 : index
      %c0_23 = arith.constant 0 : index
      %44 = vector.load %arg7[%c0_22, %c0_23] : memref<1x256xf32, #tpu.memory_space<vmem>>, vector<1x256xf32>
      tpu.vector_store %arg7[%c0_22, %c0_23], %43 {strides = array<i32>} : memref<1x256xf32, #tpu.memory_space<vmem>>, vector<1x256xf32>,
      %cst_24 = arith.constant 0.000000e+00 : f32
      %45 = vector.broadcast %cst_24 : f32 to vector<1x256xf32>
      %c0_25 = arith.constant 0 : index
      %c0_26 = arith.constant 0 : index
      %46 = vector.load %arg8[%c0_25, %c0_26] : memref<1x256xf32, #tpu.memory_space<vmem>>, vector<1x256xf32>
      tpu.vector_store %arg8[%c0_25, %c0_26], %45 {strides = array<i32>} : memref<1x256xf32, #tpu.memory_space<vmem>>, vector<1x256xf32>,
    } else {
    }
    %c0 = arith.constant 0 : index
    %c0_1 = arith.constant 0 : index
    %c0_2 = arith.constant 0 : index
    %3 = vector.load %arg3[%c0, %c0_1, %c0_2] : memref<1x1x256xi32, #tpu.memory_space<vmem>>, vector<1x1x256xi32>
    %4 = vector.shape_cast %3 : vector<1x1x256xi32> to vector<1x256xi32>
    %c0_3 = arith.constant 0 : index
    %c0_4 = arith.constant 0 : index
    %c0_5 = arith.constant 0 : index
    %5 = vector.load %arg4[%c0_3, %c0_4, %c0_5] : memref<1x4x256xf32, #tpu.memory_space<vmem>>, vector<1x4x256xf32>
    %6 = vector.shape_cast %5 : vector<1x4x256xf32> to vector<4x256xf32>
    %cst = arith.constant dense<0xFF800000> : vector<256xf32>
    %7 = vector.multi_reduction <maximumf>, %6, %cst [0] : vector<4x256xf32> to vector<256xf32>
    %8 = vector.shape_cast %7 : vector<256xf32> to vector<1x256xf32>
    %9 = vector.broadcast %8 : vector<1x256xf32> to vector<4x256xf32>
    %10 = arith.subf %6, %9 : vector<4x256xf32>
    %11 = math.exp %10 : vector<4x256xf32>
    %cst_6 = arith.constant dense<0.000000e+00> : vector<256xf32>
    %12 = vector.multi_reduction <add>, %11, %cst_6 [0] : vector<4x256xf32> to vector<256xf32>
    %13 = vector.shape_cast %12 : vector<256xf32> to vector<1x256xf32>
    %14 = math.log %13 : vector<1x256xf32>
    %15 = arith.addf %8, %14 : vector<1x256xf32>
    %c-1_i32 = arith.constant -1 : i32
    %16 = vector.broadcast %c-1_i32 : i32 to vector<1x256xi32>
    %17 = arith.cmpi ne, %4, %16 : vector<1x256xi32>
    %c0_i32_7 = arith.constant 0 : i32
    %18 = vector.broadcast %c0_i32_7 : i32 to vector<1x256xi32>
    %19 = arith.select %17, %4, %18 : vector<1x256xi1>, vector<1x256xi32>
    %20 = tpu.iota {dimensions = array<i32: 0>} : vector<4x256xi32>
    %21 = vector.broadcast %19 : vector<1x256xi32> to vector<4x256xi32>
    %22 = arith.cmpi eq, %20, %21 : vector<4x256xi32>
    %cst_8 = arith.constant 0.000000e+00 : f32
    %23 = vector.broadcast %cst_8 : f32 to vector<4x256xf32>
    %24 = arith.select %22, %6, %23 : vector<4x256xi1>, vector<4x256xf32>
    %cst_9 = arith.constant dense<0.000000e+00> : vector<256xf32>
    %25 = vector.multi_reduction <add>, %24, %cst_9 [0] : vector<4x256xf32> to vector<256xf32>
    %26 = vector.shape_cast %25 : vector<256xf32> to vector<1x256xf32>
    %27 = arith.subf %15, %26 : vector<1x256xf32>
    %cst_10 = arith.constant 0.105360515 : f32
    %28 = vector.broadcast %cst_10 : f32 to vector<1x256xf32>
    %29 = arith.cmpf ogt, %27, %28 : vector<1x256xf32>
    %30 = arith.andi %17, %29 : vector<1x256xi1>
    %31 = arith.extui %30 : vector<1x256xi1> to vector<1x256xi32>
    %32 = arith.sitofp %31 : vector<1x256xi32> to vector<1x256xf32>
    %c0_11 = arith.constant 0 : index
    %c0_12 = arith.constant 0 : index
    %33 = vector.load %arg7[%c0_11, %c0_12] : memref<1x256xf32, #tpu.memory_space<vmem>>, vector<1x256xf32>
    %34 = arith.mulf %27, %32 : vector<1x256xf32>
    %35 = arith.addf %33, %34 : vector<1x256xf32>
    %c0_13 = arith.constant 0 : index
    %c0_14 = arith.constant 0 : index
    %36 = vector.load %arg7[%c0_13, %c0_14] : memref<1x256xf32, #tpu.memory_space<vmem>>, vector<1x256xf32>
    tpu.vector_store %arg7[%c0_13, %c0_14], %35 {strides = array<i32>} : memref<1x256xf32, #tpu.memory_space<vmem>>, vector<1x256xf32>,
    %c0_15 = arith.constant 0 : index
    %c0_16 = arith.constant 0 : index
    %37 = vector.load %arg8[%c0_15, %c0_16] : memref<1x256xf32, #tpu.memory_space<vmem>>, vector<1x256xf32>
    %38 = arith.addf %37, %32 : vector<1x256xf32>
    %c0_17 = arith.constant 0 : index
    %c0_18 = arith.constant 0 : index
    %39 = vector.load %arg8[%c0_17, %c0_18] : memref<1x256xf32, #tpu.memory_space<vmem>>, vector<1x256xf32>
    tpu.vector_store %arg8[%c0_17, %c0_18], %38 {strides = array<i32>} : memref<1x256xf32, #tpu.memory_space<vmem>>, vector<1x256xf32>,
    %c0_i32_19 = arith.constant 0 : i32
    %40 = arith.cmpi eq, %arg2, %c0_i32_19 : i32
    %41 = arith.extui %40 : i1 to i32
    %c0_i32_20 = arith.constant 0 : i32
    %42 = arith.cmpi ne, %41, %c0_i32_20 : i32
    scf.if %42 {
      %c0_21 = arith.constant 0 : index
      %c0_22 = arith.constant 0 : index
      %43 = vector.load %arg7[%c0_21, %c0_22] : memref<1x256xf32, #tpu.memory_space<vmem>>, vector<1x256xf32>
      %44 = vector.shape_cast %43 : vector<1x256xf32> to vector<1x1x256xf32>
      %cst_23 = arith.constant dense<0.000000e+00> : vector<1xf32>
      %45 = vector.multi_reduction <add>, %44, %cst_23 [1, 2] : vector<1x1x256xf32> to vector<1xf32>
      %46 = vector.shape_cast %45 : vector<1xf32> to vector<1x1x1xf32>
      %47 = vector.extract %46[0, 0, 0] : f32 from vector<1x1x1xf32>
      %48 = vector.broadcast %47 : f32 to vector<1x1xf32>
      %c0_24 = arith.constant 0 : index
      %c0_25 = arith.constant 0 : index
      %c0_26 = arith.constant 0 : index
      %49 = vector.load %arg5[%c0_24, %c0_25, %c0_26] : memref<1x1x1xf32, #tpu.memory_space<vmem>>, vector<1x1x1xf32>
      %50 = vector.shape_cast %49 : vector<1x1x1xf32> to vector<1x1xf32>
      %51 = vector.shape_cast %48 : vector<1x1xf32> to vector<1x1x1xf32>
      tpu.vector_store %arg5[%c0_24, %c0_25, %c0_26], %51 {strides = array<i32>} : memref<1x1x1xf32, #tpu.memory_space<vmem>>, vector<1x1x1xf32>,
      %c0_27 = arith.constant 0 : index
      %c0_28 = arith.constant 0 : index
      %52 = vector.load %arg8[%c0_27, %c0_28] : memref<1x256xf32, #tpu.memory_space<vmem>>, vector<1x256xf32>
      %53 = vector.shape_cast %52 : vector<1x256xf32> to vector<1x1x256xf32>
      %cst_29 = arith.constant dense<0.000000e+00> : vector<1xf32>
      %54 = vector.multi_reduction <add>, %53, %cst_29 [1, 2] : vector<1x1x256xf32> to vector<1xf32>
      %55 = vector.shape_cast %54 : vector<1xf32> to vector<1x1x1xf32>
      %56 = vector.extract %55[0, 0, 0] : f32 from vector<1x1x1xf32>
      %57 = vector.broadcast %56 : f32 to vector<1x1xf32>
      %c0_30 = arith.constant 0 : index
      %c0_31 = arith.constant 0 : index
      %c0_32 = arith.constant 0 : index
      %58 = vector.load %arg6[%c0_30, %c0_31, %c0_32] : memref<1x1x1xf32, #tpu.memory_space<vmem>>, vector<1x1x1xf32>
      %59 = vector.shape_cast %58 : vector<1x1x1xf32> to vector<1x1xf32>
      %60 = vector.shape_cast %57 : vector<1x1xf32> to vector<1x1x1xf32>
      tpu.vector_store %arg6[%c0_30, %c0_31, %c0_32], %60 {strides = array<i32>} : memref<1x1x1xf32, #tpu.memory_space<vmem>>, vector<1x1x1xf32>,
    } else {
    }
    return
  }
  func.func @transform_0(%arg0: i32, %arg1: i32, %arg2: i32) -> (i32, i32, i32) {
    %c1_i32 = arith.constant 1 : i32
    %0 = arith.muli %arg1, %c1_i32 : i32
    %1 = arith.addi %0, %arg2 : i32
    %c0_i32 = arith.constant 0 : i32
    %c0_i32_0 = arith.constant 0 : i32
    return %arg0, %c0_i32, %1 : i32, i32, i32
  }
  func.func @transform_1(%arg0: i32, %arg1: i32, %arg2: i32) -> (i32, i32, i32) {
    %c1_i32 = arith.constant 1 : i32
    %0 = arith.muli %arg1, %c1_i32 : i32
    %1 = arith.addi %0, %arg2 : i32
    %c0_i32 = arith.constant 0 : i32
    %c0_i32_0 = arith.constant 0 : i32
    return %arg0, %c0_i32, %1 : i32, i32, i32
  }
  func.func @transform_2(%arg0: i32, %arg1: i32, %arg2: i32) -> (i32, i32, i32) {
    %c1_i32 = arith.constant 1 : i32
    %0 = arith.muli %arg0, %c1_i32 : i32
    %1 = arith.addi %0, %arg1 : i32
    %c0_i32 = arith.constant 0 : i32
    %c0_i32_0 = arith.constant 0 : i32
    %c0_i32_1 = arith.constant 0 : i32
    return %1, %c0_i32, %c0_i32_0 : i32, i32, i32
  }
  func.func @transform_3(%arg0: i32, %arg1: i32, %arg2: i32) -> (i32, i32, i32) {
    %c1_i32 = arith.constant 1 : i32
    %0 = arith.muli %arg0, %c1_i32 : i32
    %1 = arith.addi %0, %arg1 : i32
    %c0_i32 = arith.constant 0 : i32
    %c0_i32_0 = arith.constant 0 : i32
    %c0_i32_1 = arith.constant 0 : i32
    return %1, %c0_i32, %c0_i32_0 : i32, i32, i32
  }
}

</mosaic_0001>

<llo_original>
// kernel: tpu_custom_call.1
$region0: #{tpu_custom_call.1}
  #allocation0 [shape = 'u32[]', space=smem, size = 0x4, offset = 0x4, fixed_abs, tag = 'smem constant byte address 0x4 - core index']
  #allocation1 [shape = 'u32[144,128]{1,0:T(1,128)}', space=vmem, size = 0x12000, scoped, tag = 'internal scratch']
  #allocation2 [shape = 'f32[1,256]{1,0:T(1,128)}', space=vmem, size = 0x400, scoped, tag = 'scratch operand']
  #allocation3 [shape = 'f32[1,256]{1,0:T(1,128)}', space=vmem, size = 0x400, scoped, tag = 'scratch operand']
  %s0 = inlined_call_operand.hbm [shape: s32[2,1,256], index: 0, kind: input, shape index: {}]
  %s1 = inlined_call_operand.hbm [shape: f32[2,4,256], index: 1, kind: input, shape index: {}]
  %s2 = inlined_call_operand.vmem [shape: f32[2,1,1], index: 2, kind: output, shape index: {0}]
  %s3 = inlined_call_operand.vmem [shape: f32[2,1,1], index: 3, kind: output, shape index: {1}]
  %4 = xla_tuple %s2, %s3
  %s5 = sld [smem:[#allocation0]]
  $region65: #{tpu_custom_call.1} parent=0
    _
  %s7 = ssub.s32 1, %s5
  %s8 = scalar_select 0, %s7, %s5
  $region1: #{tpu_custom_call.1} parent=0
    #allocation4 [shape = 'u8[2048]{0}', space=vmem, size = 0x800, scoped, tag = 'input window, operand 0']
    #allocation5 [shape = 's32[2]{0}', space=sflag, size = 0x8, scoped, tag = 'scoped memory for tpu_custom_call.1']
    #allocation6 [shape = 'u8[8192]{0}', space=vmem, size = 0x2000, scoped, tag = 'input window, operand 1']
    #allocation7 [shape = 's32[2]{0}', space=sflag, size = 0x8, scoped, tag = 'scoped memory for tpu_custom_call.1']
    %9 = vsyncpa [#allocation5], 0
    %s10 = scalar_lea.sflag [#allocation5], 1
    %11 = vsyncpa %s10, 0
    %12 = vsyncpa [#allocation7], 0
    %s13 = scalar_lea.sflag [#allocation7], 1
    %14 = vsyncpa %s13, 0
    loop: start=0, step=1, limit=4
    $region2: #{tpu_custom_call.1} parent=1 // loop_pre_header
      _
    $region3: #{tpu_custom_call.1} parent=1 // loop_header
      %s16 = sphi 0, %s20
      %p17 = scmp.ge.s32.totalorder %s16, 4
      %s23 = sphi 0, %s42
      %s24 = sphi 0, %s38
      %s25 = sphi 0, %s34
      %s26 = sphi 0, %s23
      %s27 = sphi 0, %s24
      %s28 = sphi 0, %s25
      %s29 = sphi 0, %s26
      %s30 = sphi 0, %s27
      %s31 = sphi 0, %s28
      %s49 = sphi 0, %s51
      %s52 = sphi 0, %s49
      %s53 = sphi 0, %s52
      %s69 = sphi 0, %s53
      %s79 = sphi 0, %s81
      %s82 = sphi 0, %s79
      %s83 = sphi 0, %s82
      %s99 = sphi 0, %s83
      %s107 = sphi 0, %s109
      %s110 = sphi 0, %s107
      %s111 = sphi 0, %s110
      %s127 = sphi 0, %s111
      %s135 = sphi 0, %s137
      %s138 = sphi 0, %s135
      %s139 = sphi 0, %s138
      %s155 = sphi 0, %s139
    $region4: #{tpu_custom_call.1} parent=1 // loop_header_branch
      %19 = sbr.rel (%p17) target = $region8
    $region5: #{tpu_custom_call.1} parent=1 // loop_body
      %s21 = ssub.s32 %s16, 1
      %s22 = ssub.s32 %s16, 2
      %s32 = sadd.s32 1, %s25
      %p33 = scmp.ge.s32.totalorder %s32, 1
      %s34 = scalar_select %p33, 0, %s32
      %s35 = sadd.s32 1, %s24
      %s36 = scalar_select %p33, %s35, %s24
      %p37 = scmp.ge.s32.totalorder %s36, 1
      %s38 = scalar_select %p37, 0, %s36
      %s39 = sadd.s32 1, %s23
      %s40 = scalar_select %p37, %s39, %s23
      %p41 = scmp.ge.s32.totalorder %s40, 2
      %s42 = scalar_select %p41, 0, %s40
      %s43 = sadd.s32 %s24, %s25
      %s44 = sadd.s32 %s38, %s34
      %s45 = ssub.s32 %s23, %s42
      %s46 = ssub.s32 %s43, %s44
      %s47 = sor.u32 %s45, %s46
      %p48 = scmp.eq.s32.totalorder %s47, 0
      %s50 = sadd.s32 %s49, 1
      %s51 = scalar_select %p48, %s49, %s50
      %p54 = pneg %p48
      %p55 = scmp.eq.s32.totalorder %s16, 1
      %p56 = por %p54, %p55
      %p57 = scmp.ne.s32.totalorder %s49, %s52
      %p58 = scmp.eq.s32.totalorder %s16, 0
      %p59 = por %p57, %p58
      %p60 = scmp.ne.s32.totalorder %s49, %s52
      %p61 = scmp.eq.s32.totalorder %s21, 1
      %p62 = por %p60, %p61
      %p63 = scmp.ne.s32.totalorder %s52, %s53
      %p64 = scmp.eq.s32.totalorder %s21, 0
      %p65 = por %p63, %p64
      %p66 = scmp.ne.s32.totalorder %s52, %s53
      %p67 = scmp.eq.s32.totalorder %s22, 1
      %p68 = por %p66, %p67
      %p70 = scmp.ne.s32.totalorder %s53, %s69
      %p71 = scmp.eq.s32.totalorder %s22, 0
      %p72 = por %p70, %p71
      %s73 = sadd.s32 %s24, %s25
      %s74 = sadd.s32 %s38, %s34
      %s75 = ssub.s32 %s23, %s42
      %s76 = ssub.s32 %s73, %s74
      %s77 = sor.u32 %s75, %s76
      %p78 = scmp.eq.s32.totalorder %s77, 0
      %s80 = sadd.s32 %s79, 1
      %s81 = scalar_select %p78, %s79, %s80
      %p84 = pneg %p78
      %p85 = scmp.eq.s32.totalorder %s16, 1
      %p86 = por %p84, %p85
      %p87 = scmp.ne.s32.totalorder %s79, %s82
      %p88 = scmp.eq.s32.totalorder %s16, 0
      %p89 = por %p87, %p88
      %p90 = scmp.ne.s32.totalorder %s79, %s82
      %p91 = scmp.eq.s32.totalorder %s21, 1
      %p92 = por %p90, %p91
      %p93 = scmp.ne.s32.totalorder %s82, %s83
      %p94 = scmp.eq.s32.totalorder %s21, 0
      %p95 = por %p93, %p94
      %p96 = scmp.ne.s32.totalorder %s82, %s83
      %p97 = scmp.eq.s32.totalorder %s22, 1
      %p98 = por %p96, %p97
      %p100 = scmp.ne.s32.totalorder %s83, %s99
      %p101 = scmp.eq.s32.totalorder %s22, 0
      %p102 = por %p100, %p101
      %s103 = sadd.s32 %s23, %s24
      %s104 = sadd.s32 %s42, %s38
      %s105 = ssub.s32 %s103, %s104
      %p106 = scmp.eq.s32.totalorder %s105, 0
      %s108 = sadd.s32 %s107, 1
      %s109 = scalar_select %p106, %s107, %s108
      %p112 = pneg %p106
      %p113 = scmp.eq.s32.totalorder %s16, 1
      %p114 = por %p112, %p113
      %p115 = scmp.ne.s32.totalorder %s107, %s110
      %p116 = scmp.eq.s32.totalorder %s16, 0
      %p117 = por %p115, %p116
      %p118 = scmp.ne.s32.totalorder %s107, %s110
      %p119 = scmp.eq.s32.totalorder %s21, 1
      %p120 = por %p118, %p119
      %p121 = scmp.ne.s32.totalorder %s110, %s111
      %p122 = scmp.eq.s32.totalorder %s21, 0
      %p123 = por %p121, %p122
      %p124 = scmp.ne.s32.totalorder %s110, %s111
      %p125 = scmp.eq.s32.totalorder %s22, 1
      %p126 = por %p124, %p125
      %p128 = scmp.ne.s32.totalorder %s111, %s127
      %p129 = scmp.eq.s32.totalorder %s22, 0
      %p130 = por %p128, %p129
      %s131 = sadd.s32 %s23, %s24
      %s132 = sadd.s32 %s42, %s38
      %s133 = ssub.s32 %s131, %s132
      %p134 = scmp.eq.s32.totalorder %s133, 0
      %s136 = sadd.s32 %s135, 1
      %s137 = scalar_select %p134, %s135, %s136
      %p140 = pneg %p134
      %p141 = scmp.eq.s32.totalorder %s16, 1
      %p142 = por %p140, %p141
      %p143 = scmp.ne.s32.totalorder %s135, %s138
      %p144 = scmp.eq.s32.totalorder %s16, 0
      %p145 = por %p143, %p144
      %p146 = scmp.ne.s32.totalorder %s135, %s138
      %p147 = scmp.eq.s32.totalorder %s21, 1
      %p148 = por %p146, %p147
      %p149 = scmp.ne.s32.totalorder %s138, %s139
      %p150 = scmp.eq.s32.totalorder %s21, 0
      %p151 = por %p149, %p150
      %p152 = scmp.ne.s32.totalorder %s138, %s139
      %p153 = scmp.eq.s32.totalorder %s22, 1
      %p154 = por %p152, %p153
      %p156 = scmp.ne.s32.totalorder %s139, %s155
      %p157 = scmp.eq.s32.totalorder %s22, 0
      %p158 = por %p156, %p157
      %p159 = scmp.le.s32.totalorder 1, %s16
      %p160 = scmp.lt.s32.totalorder %s16, 3
      %p161 = pnand %p159, %p160
      %p162 = pneg %p161
      // Predicated region
      $region9: #{tpu_custom_call.1} parent=5 // pred_check
        _
      $region10: #{tpu_custom_call.1} parent=5 // pred_check_branch
        %164 = sbr.rel (%p161) target = $region12
      $region11: #{tpu_custom_call.1} parent=5 // pred_region
        %s165 = ssub.s32 %s16, 1
      $region12: #{tpu_custom_call.1} parent=5 // pred_fallthru
        _
      %p166 = scmp.lt.s32.totalorder %s16, 2
      // Predicated region
      $region13: #{tpu_custom_call.1} parent=5 // pred_check
        %p167 = pneg %p166
      $region14: #{tpu_custom_call.1} parent=5 // pred_check_branch
        %169 = sbr.rel (%p167) target = $region16
      $region15: #{tpu_custom_call.1} parent=5 // pred_region
        // Predicated region
        $region17: #{tpu_custom_call.1} parent=15 // pred_check
          %p170 = pneg %p59
        $region18: #{tpu_custom_call.1} parent=15 // pred_check_branch
          %172 = sbr.rel (%p170) target = $region20
        $region19: #{tpu_custom_call.1} parent=15 // pred_region
          %s173 = sand.u32 %s49, 1
          %s174 = scalar_lea.sflag [#allocation5], %s173
          %s175 = sand.u32 %s49, 1
          %s176 = smul.addr %s175, 2
          %s177 = scalar_lea.vmem [#allocation4], %s176
          %s178 = sadd.s32 %s24, %s25
          %s179 = smul.u32 2, %s178
          %s181 = ssub.s32 32, 32
          %182 = vsyncadd %s174, %s181
          %s183 = smul.addr %s23, 2
          %s184 = sadd.s32 %s179, %s183
          %s185 = smul.addr %s184, 16
          %s186 = scalar_lea.hbm %s0, %s185
          %s188 = sshll.u32 %s177, 4
          %s189 = int_to_ptr.vmem [resolvable:$true] %s188
          %191 = dma.hbm_to_vmem [thread:$0]  %s186, 32, %s189, %s174
        $region20: #{tpu_custom_call.1} parent=15 // pred_fallthru
          _
        // Predicated region
        $region21: #{tpu_custom_call.1} parent=15 // pred_check
          %p192 = pneg %p89
        $region22: #{tpu_custom_call.1} parent=15 // pred_check_branch
          %194 = sbr.rel (%p192) target = $region24
        $region23: #{tpu_custom_call.1} parent=15 // pred_region
          %s195 = sand.u32 %s79, 1
          %s196 = scalar_lea.sflag [#allocation7], %s195
          %s197 = sand.u32 %s79, 1
          %s198 = smul.addr %s197, 8
          %s199 = scalar_lea.vmem [#allocation6], %s198
          %s200 = sadd.s32 %s24, %s25
          %s201 = smul.u32 2, %s200
          %s203 = ssub.s32 128, 128
          %204 = vsyncadd %s196, %s203
          %s205 = smul.addr %s23, 2
          %s206 = sadd.s32 %s201, %s205
          %s207 = smul.addr %s206, 64
          %s208 = scalar_lea.hbm %s1, %s207
          %s210 = sshll.u32 %s199, 4
          %s211 = int_to_ptr.vmem [resolvable:$true] %s210
          %213 = dma.hbm_to_vmem [thread:$0]  %s208, 128, %s211, %s196
        $region24: #{tpu_custom_call.1} parent=15 // pred_fallthru
          _
      $region16: #{tpu_custom_call.1} parent=5 // pred_fallthru
        _
      %p214 = scmp.le.s32.totalorder 1, %s16
      %p215 = scmp.lt.s32.totalorder %s16, 3
      %p216 = pnand %p214, %p215
      %p217 = pneg %p216
      // Predicated region
      $region25: #{tpu_custom_call.1} parent=5 // pred_check
        _
      $region26: #{tpu_custom_call.1} parent=5 // pred_check_branch
        %219 = sbr.rel (%p216) target = $region28
      $region27: #{tpu_custom_call.1} parent=5 // pred_region
        %s220 = ssub.s32 %s16, 1
        %s221 = sand.u32 %s52, 1
        %s222 = scalar_lea.sflag [#allocation5], %s221
        %s223 = sand.u32 %s52, 1
        %s224 = smul.addr %s223, 2
        %s225 = scalar_lea.vmem [#allocation4], %s224
        // Predicated region
        $region29: #{tpu_custom_call.1} parent=27 // pred_check
          %p226 = pneg %p65
        $region30: #{tpu_custom_call.1} parent=27 // pred_check_branch
          %228 = sbr.rel (%p226) target = $region32
        $region31: #{tpu_custom_call.1} parent=27 // pred_region
          %229 = dma.done %s222, 32
        $region32: #{tpu_custom_call.1} parent=27 // pred_fallthru
          _
        %s230 = sand.u32 %s82, 1
        %s231 = scalar_lea.sflag [#allocation7], %s230
        %s232 = sand.u32 %s82, 1
        %s233 = smul.addr %s232, 8
        %s234 = scalar_lea.vmem [#allocation6], %s233
        // Predicated region
        $region33: #{tpu_custom_call.1} parent=27 // pred_check
          %p235 = pneg %p95
        $region34: #{tpu_custom_call.1} parent=27 // pred_check_branch
          %237 = sbr.rel (%p235) target = $region36
        $region35: #{tpu_custom_call.1} parent=27 // pred_region
          %238 = dma.done %s231, 128
        $region36: #{tpu_custom_call.1} parent=27 // pred_fallthru
          _
        %s239 = sand.u32 %s52, 1
        %s240 = scalar_lea.sflag [#allocation5], %s239
        %s241 = sand.u32 %s52, 1
        %s242 = smul.addr %s241, 2
        %s243 = scalar_lea.vmem [#allocation4], %s242
        %p244 = pneg %p65
        %p245 = pneg %p62
        %s246 = sand.u32 %s82, 1
        %s247 = scalar_lea.sflag [#allocation7], %s246
        %s248 = sand.u32 %s82, 1
        %s249 = smul.addr %s248, 8
        %s250 = scalar_lea.vmem [#allocation6], %s249
        %p251 = pneg %p95
        %p252 = pneg %p92
        %p253 = pneg %p123
        %p254 = pneg %p120
        %s255 = sadd.s32 %s26, %s27
        %p256 = scmp.lt.s32.totalorder %s255, 1
        %s257 = scalar_select %p256, %s255, 1
        %s258 = scalar_lea.vmem %s2, %s257
        %p259 = pneg %p151
        %p260 = pneg %p148
        %s261 = sadd.s32 %s26, %s27
        %p262 = scmp.lt.s32.totalorder %s261, 1
        %s263 = scalar_select %p262, %s261, 1
        %s264 = scalar_lea.vmem %s3, %s263
        %s265 = sadd.s32 %s27, %s28
        %s266 = smul.u32 2, %s265
        %s267 = sadd.s32 %s27, %s28
        %s268 = smul.u32 2, %s267
        %s269 = sadd.s32 %s26, %s27
        %p270 = scmp.lt.s32.totalorder %s269, 1
        %s271 = scalar_select %p270, %s269, 1
        %s272 = scalar_lea.vmem %s2, %s271
        %s273 = sadd.s32 %s26, %s27
        %s274 = sadd.s32 %s26, %s27
        %p275 = scmp.lt.s32.totalorder %s274, 1
        %s276 = scalar_select %p275, %s274, 1
        %s277 = scalar_lea.vmem %s3, %s276
        %s278 = sadd.s32 %s26, %s27
        %p279 = scmp.eq.s32.totalorder %s28, 0
        // Predicated region
        $region37: #{tpu_custom_call.1} parent=27 // pred_check
          %p280 = pneg %p279
        $region38: #{tpu_custom_call.1} parent=27 // pred_check_branch
          %282 = sbr.rel (%p280) target = $region40
        $region39: #{tpu_custom_call.1} parent=27 // pred_region
          %v283 = vlaneseq
          %vm284 = vcmp.ge.s32.totalorder %v283, 0
          %vm285 = vcmp.lt.s32.totalorder %v283, 256
          %vm286 = vmand %vm284, %vm285
          %287 = vst.msk [vmem:[#allocation2] sm:$0x3] %vm286, 0.0
          %288 = vst.msk [vmem:[#allocation3] sm:$0x3] %vm286, 0.0
        $region40: #{tpu_custom_call.1} parent=27 // pred_fallthru
          _
        %v289 = vld [vmem:[%s225] sm:$0x3]
        %v290 = vld [vmem:[%s234] sm:$0xff]
        %v292 = vcombine.high %v290, %v290
        %vm294 = vcmask 1043456
        %v295 = vsel %vm294, %v290, -inf
        %v296 = vrot.slane %v295, 4
        %v297 = vmax.f32 %v295, %v296
        %v298 = vrot.slane %v297, 2
        %v299 = vmax.f32 %v297, %v298
        %v300 = vrot.slane %v299, 1
        %v301 = vmax.f32 %v299, %v300
        %v302 = vsel %vm294, %v292, -inf
        %v303 = vrot.slane %v302, 4
        %v304 = vmax.f32 %v302, %v303
        %v305 = vrot.slane %v304, 2
        %v306 = vmax.f32 %v304, %v305
        %v307 = vrot.slane %v306, 1
        %v308 = vmax.f32 %v306, %v307
        %v311 = vcombine.low %v301, %v308
        %v313 = vsub.f32 %v290, %v311
        %v314 = vmul.f32 %v313, 1.442695
        %v315 = vpow.pop %v314
        %v317 = vcombine.high %v315, %v315
        %v319 = vsel %vm294, %v315, 0.0
        %v320 = vrot.slane %v319, 4
        %v321 = vadd.f32 %v319, %v320
        %v322 = vrot.slane %v321, 2
        %v323 = vadd.f32 %v321, %v322
        %v324 = vrot.slane %v323, 1
        %v325 = vadd.f32 %v323, %v324
        %v326 = vsel %vm294, %v317, 0.0
        %v327 = vrot.slane %v326, 4
        %v328 = vadd.f32 %v326, %v327
        %v329 = vrot.slane %v328, 2
        %v330 = vadd.f32 %v328, %v329
        %v331 = vrot.slane %v330, 1
        %v332 = vadd.f32 %v330, %v331
        %v333 = vlog2.pop %v325
        %v334 = vmul.f32 %v333, 0.6931472
        %v335 = vlog2.pop %v332
        %v336 = vmul.f32 %v335, 0.6931472
        %v337 = vadd.f32 %v301, %v334
        %v338 = vadd.f32 %v308, %v336
        %vm339 = vcmp.ne.s32.totalorder %v289, 4294967295
        %v340 = vsel %vm339, %v289, 0
        %v341 = vlaneseq
        %v342 = vshrl.u32 %v341, 7
        %v343 = vlaneseq
        %v344 = vshrl.u32 %v343, 7
        %v345 = vsub.s32 0, %v344
        %v346 = vrot.slane %v340, %v345
        %v347 = vlaneseq
        %v348 = vshrl.u32 %v347, 7
        %v349 = vsub.s32 1, %v348
        %v350 = vrot.slane %v340, %v349
        %vm351 = vcmp.eq.s32.totalorder %v342, %v346
        %vm352 = vcmp.eq.s32.totalorder %v342, %v350
        %v353 = vsel %vm351, %v290, 0.0
        %v354 = vsel %vm352, %v292, 0.0
        %v355 = vsel %vm294, %v353, 0.0
        %v356 = vrot.slane %v355, 4
        %v357 = vadd.f32 %v355, %v356
        %v358 = vrot.slane %v357, 2
        %v359 = vadd.f32 %v357, %v358
        %v360 = vrot.slane %v359, 1
        %v361 = vadd.f32 %v359, %v360
        %v362 = vsel %vm294, %v354, 0.0
        %v363 = vrot.slane %v362, 4
        %v364 = vadd.f32 %v362, %v363
        %v365 = vrot.slane %v364, 2
        %v366 = vadd.f32 %v364, %v365
        %v367 = vrot.slane %v366, 1
        %v368 = vadd.f32 %v366, %v367
        %v369 = vsub.f32 %v337, %v361
        %v370 = vsub.f32 %v338, %v368
        %vm371 = vcmp.gt.f32.partialorder %v369, 0.105360515
        %vm372 = vcmp.gt.f32.partialorder %v370, 0.105360515
        %v373 = vsel %vm371, 1, 0
        %v374 = vsel %vm372, 1, 0
        %v375 = vcombine.low %v373, %v374
        %v377 = vunpack.c.l.s4 1966171168
        %v378 = vunpack.c.0.s8 %v377
        %v379 = vlaneseq
        %v380 = vshrl.u32 %v379, 7
        %v381 = vsub.s32 %v378, %v380
        %v382 = vrot.slane %v375, %v381
        %v384 = vunpack.c.l.s4 1966171168
        %v385 = vunpack.c.0.s8 %v384
        %v386 = vlaneseq
        %v387 = vshrl.u32 %v386, 7
        %v388 = vsub.s32 %v385, %v387
        %v389 = vrot.slane %v382, %v388
        %vm390 = vcmp.ne.s32.totalorder %v389, 0
        %vm391 = vmand %vm339, %vm390
        %v392 = vsel %vm391, 1, 0
        %v393 = vcvt.s32.f32 %v392
        %v394 = vld [vmem:[#allocation2] sm:$0x3]
        %v396 = vlaneseq
        %v397 = vshrl.u32 %v396, 7
        %v398 = vsub.s32 0, %v397
        %v399 = vrot.slane %v393, %v398
        %v400 = vlaneseq
        %v401 = vshrl.u32 %v400, 7
        %v402 = vsub.s32 1, %v401
        %v403 = vrot.slane %v393, %v402
        %v406 = vmul.f32 %v369, %v399
        %v407 = vmul.f32 %v370, %v403
        %v410 = vcombine.low %v406, %v407
        %v412 = vunpack.c.l.s4 1966171168
        %v413 = vunpack.c.0.s8 %v412
        %v414 = vlaneseq
        %v415 = vshrl.u32 %v414, 7
        %v416 = vsub.s32 %v413, %v415
        %v417 = vrot.slane %v410, %v416
        %v419 = vunpack.c.l.s4 1966171168
        %v420 = vunpack.c.0.s8 %v419
        %v421 = vlaneseq
        %v422 = vshrl.u32 %v421, 7
        %v423 = vsub.s32 %v420, %v422
        %v424 = vrot.slane %v417, %v423
        %v426 = vadd.f32 %v394, %v424
        %v427 = vlaneseq
        %vm428 = vcmp.ge.s32.totalorder %v427, 0
        %vm429 = vcmp.lt.s32.totalorder %v427, 256
        %vm430 = vmand %vm428, %vm429
        %431 = vst.msk [vmem:[#allocation2] sm:$0x3] %vm430, %v426
        %v432 = vld [vmem:[#allocation3] sm:$0x3]
        %v433 = vadd.f32 %v432, %v393
        %434 = vst.msk [vmem:[#allocation3] sm:$0x3] %vm430, %v433
        // Predicated region
        $region41: #{tpu_custom_call.1} parent=27 // pred_check
          %p435 = pneg %p279
        $region42: #{tpu_custom_call.1} parent=27 // pred_check_branch
          %437 = sbr.rel (%p435) target = $region44
        $region43: #{tpu_custom_call.1} parent=27 // pred_region
          %v438 = vld [vmem:[#allocation2] sm:$0x3]
          %v440 = vlaneseq
          %v441 = vshrl.u32 %v440, 7
          %v442 = vsub.s32 0, %v441
          %v443 = vrot.slane %v438, %v442
          %v444 = vlaneseq
          %v445 = vshrl.u32 %v444, 7
          %v446 = vsub.s32 1, %v445
          %v447 = vrot.slane %v438, %v446
          %vm450 = vcmask 1040384
          %v451 = vsel %vm450, %v443, 0.0
          %v452 = vsel %vm450, %v447, 0.0
          %v453 = vadd.f32 %v451, %v452
          %454 = vadd.xlane.f32.xlu0 %v453
          %v455 = vpop.xlane.xlu0 %454
          %v456 = vrot.slane %v455, 4
          %v457 = vadd.f32 %v455, %v456
          %v458 = vrot.slane %v457, 2
          %v459 = vadd.f32 %v457, %v458
          %v460 = vrot.slane %v459, 1
          %v461 = vadd.f32 %v459, %v460
          %s462 = vtos %v461
          %v463 = vstv %s462
          %vm464 = vcmask 0
          %465 = vst.msk [vmem:[%s272] sm:$0x1] %vm464, %v463
          %v466 = vld [vmem:[#allocation3] sm:$0x3]
          %v468 = vlaneseq
          %v469 = vshrl.u32 %v468, 7
          %v470 = vsub.s32 0, %v469
          %v471 = vrot.slane %v466, %v470
          %v472 = vlaneseq
          %v473 = vshrl.u32 %v472, 7
          %v474 = vsub.s32 1, %v473
          %v475 = vrot.slane %v466, %v474
          %v478 = vsel %vm450, %v471, 0.0
          %v479 = vsel %vm450, %v475, 0.0
          %v480 = vadd.f32 %v478, %v479
          %481 = vadd.xlane.f32.xlu0 %v480
          %v482 = vpop.xlane.xlu0 %481
          %v483 = vrot.slane %v482, 4
          %v484 = vadd.f32 %v482, %v483
          %v485 = vrot.slane %v484, 2
          %v486 = vadd.f32 %v484, %v485
          %v487 = vrot.slane %v486, 1
          %v488 = vadd.f32 %v486, %v487
          %s489 = vtos %v488
          %v490 = vstv %s489
          %491 = vst.msk [vmem:[%s277] sm:$0x1] %vm464, %v490
        $region44: #{tpu_custom_call.1} parent=27 // pred_fallthru
          _
        %s492 = sadd.s32 %s26, %s27
        %p493 = scmp.lt.s32.totalorder %s492, 1
        %s494 = scalar_select %p493, %s492, 1
        %s495 = scalar_lea.vmem %s2, %s494
        %s496 = sadd.s32 %s26, %s27
        %p497 = scmp.lt.s32.totalorder %s496, 1
        %s498 = scalar_select %p497, %s496, 1
        %s499 = scalar_lea.vmem %s3, %s498
        // Predicated region
        $region45: #{tpu_custom_call.1} parent=27 // pred_check
          %p500 = pneg %p120
        $region46: #{tpu_custom_call.1} parent=27 // pred_check_branch
          %502 = sbr.rel (%p500) target = $region48
        $region47: #{tpu_custom_call.1} parent=27 // pred_region
          %s503 = sadd.s32 %s26, %s27
        $region48: #{tpu_custom_call.1} parent=27 // pred_fallthru
          _
        // Predicated region
        $region49: #{tpu_custom_call.1} parent=27 // pred_check
          %p504 = pneg %p148
        $region50: #{tpu_custom_call.1} parent=27 // pred_check_branch
          %506 = sbr.rel (%p504) target = $region52
        $region51: #{tpu_custom_call.1} parent=27 // pred_region
          %s507 = sadd.s32 %s26, %s27
        $region52: #{tpu_custom_call.1} parent=27 // pred_fallthru
          _
      $region28: #{tpu_custom_call.1} parent=5 // pred_fallthru
        _
      %p508 = scmp.le.s32.totalorder 2, %s16
      // Predicated region
      $region53: #{tpu_custom_call.1} parent=5 // pred_check
        %p509 = pneg %p508
      $region54: #{tpu_custom_call.1} parent=5 // pred_check_branch
        %511 = sbr.rel (%p509) target = $region56
      $region55: #{tpu_custom_call.1} parent=5 // pred_region
        %s512 = ssub.s32 %s16, 2
        // Predicated region
        $region57: #{tpu_custom_call.1} parent=55 // pred_check
          %p513 = pneg %p126
        $region58: #{tpu_custom_call.1} parent=55 // pred_check_branch
          %515 = sbr.rel (%p513) target = $region60
        $region59: #{tpu_custom_call.1} parent=55 // pred_region
          %s516 = sadd.s32 %s29, %s30
          %p517 = scmp.lt.s32.totalorder %s516, 1
          %s518 = scalar_select %p517, %s516, 1
          %s519 = scalar_lea.vmem %s2, %s518
        $region60: #{tpu_custom_call.1} parent=55 // pred_fallthru
          _
        // Predicated region
        $region61: #{tpu_custom_call.1} parent=55 // pred_check
          %p520 = pneg %p154
        $region62: #{tpu_custom_call.1} parent=55 // pred_check_branch
          %522 = sbr.rel (%p520) target = $region64
        $region63: #{tpu_custom_call.1} parent=55 // pred_region
          %s523 = sadd.s32 %s29, %s30
          %p524 = scmp.lt.s32.totalorder %s523, 1
          %s525 = scalar_select %p524, %s523, 1
          %s526 = scalar_lea.vmem %s3, %s525
        $region64: #{tpu_custom_call.1} parent=55 // pred_fallthru
          _
      $region56: #{tpu_custom_call.1} parent=5 // pred_fallthru
        _
    $region6: #{tpu_custom_call.1} parent=1 // loop_footer
      %s20 = sadd.s32 1, %s16
    $region7: #{tpu_custom_call.1} parent=1 // loop_footer_branch
      %15 = sbr.rel target = $region3
    $region8: #{tpu_custom_call.1} parent=1 // loop_exit
      _
    %527 = vsyncpa [#allocation5], 1
    %s528 = scalar_lea.sflag [#allocation5], 1
    %529 = vsyncpa %s528, 1
    %530 = vsyncpa [#allocation7], 1
    %s531 = scalar_lea.sflag [#allocation7], 1
    %532 = vsyncpa %s531, 1

</llo_original>
